<compile_context>
chip_gen: v5e
topology: v5e:2x2
jax: 0.10.0
libtpu: 0.0.40
codegen_flags: <defaults>
</compile_context>

<pallas_src>
import math

import jax
import jax.numpy as jnp
from jax.experimental import pallas as pl
from jax.experimental.pallas import tpu as pltpu


# ----------------------------- Pallas kernel ------------------------------ #

def _gfp_kernel(x_ref, w_ref, o_ref):
    """x_ref: (tb, 1) f32, w_ref: (1, E) f32 (already scaled by 2*pi), o_ref: (tb, 2E)."""
    E = w_ref.shape[1]
    # (tb, 1) * (1, E) -> (tb, E): per-row scalar broadcast across lanes (VPU),
    # then sin/cos on the EUP; two lane-aligned half-stores (no concat temporary).
    x_proj = x_ref[...] * w_ref[...]
    o_ref[:, :E] = jnp.sin(x_proj)
    o_ref[:, E:] = jnp.cos(x_proj)


# ------------------------------- wrapper ----------------------------------- #

def _pick_tb(B, cap=1024):
    """Row tile: multiple of 8 (sublane), capped, even >=2-step grid when possible."""
    if B % 8 != 0 or B < 16:
        return B                              # single full-extent block (valid tiling)
    n_steps = max(2, 2 * (-(-B // (2 * cap))))  # even step count, each tile <= cap
    tb = -(-B // n_steps)
    tb = ((tb + 7) // 8) * 8
    return min(tb, B)


def make_gaussian_fourier_projection(W):
    """Returns a jitted forward fn closing over the fixed weights (2*pi pre-folded).

    W: (E,) fixed Gaussian weights (requires_grad=False in the torch module).
    Returned fn maps x: (B,) -> (B, 2*E) float32.
    Note: E % 128 == 0 keeps every store lane-dense (module default E=256 qualifies);
    other E values are still correct, just use masked stores.
    """
    E = W.shape[0]
    # Init-time constant fold of the 2*pi scale into the fixed weights.
    w_row = (W.astype(jnp.float32) * jnp.float32(2.0 * math.pi)).reshape(1, E)

    @jax.jit
    def fwd(x):
        x2d = x.astype(jnp.float32).reshape(-1, 1)
        B = x2d.shape[0]
        tb = _pick_tb(B)
        grid = (pl.cdiv(B, tb),)
        return pl.pallas_call(
            _gfp_kernel,
            out_shape=jax.ShapeDtypeStruct((B, 2 * E), jnp.float32),
            grid_spec=pltpu.PrefetchScalarGridSpec(
                num_scalar_prefetch=0,
                grid=grid,
                in_specs=[pl.BlockSpec((tb, 1), lambda i: (i, 0)),
                          pl.BlockSpec((1, E), lambda i: (0, 0))],
                out_specs=pl.BlockSpec((tb, 2 * E), lambda i: (i, 0)),
            ),
            compiler_params=pltpu.CompilerParams(dimension_semantics=("parallel",)),
        )(x2d, w_row)

    return fwd


def gaussian_fourier_projection(x, W):
    """Convenience one-shot wrapper matching the torch forward signature."""
    return make_gaussian_fourier_projection(W)(x)


# ---------------------------------- main ----------------------------------- #

if __name__ == "__main__":
    key = jax.random.PRNGKey(0)
    kw, kx = jax.random.split(key)

    # Module default config: embedding_size=256 -> output width 512 (lane-dense).
    embedding_size = 256
    scale = 1.0
    batch = 8

    # W = randn(embedding_size) * scale   (fixed, requires_grad=False in the torch module)
    W = jax.random.normal(kw, (embedding_size,), jnp.float32) * scale
    x = jax.random.normal(kx, (batch,), jnp.float32)

    gfp = make_gaussian_fourier_projection(W)
    out = jax.block_until_ready(gfp(x))

    # Pure-JAX reference of the torch forward.
    x_proj = x[:, None] * W[None, :] * (2.0 * math.pi)
    ref = jnp.concatenate([jnp.sin(x_proj), jnp.cos(x_proj)], axis=-1)

    assert out.shape == (batch, 2 * embedding_size), out.shape
    assert bool(jnp.all(jnp.isfinite(out)))
    assert bool(jnp.allclose(out, ref, atol=1e-5, rtol=1e-5))
    print("KERNEL_OK")
</pallas_src>

<mosaic_0001>
module attributes {stable_mosaic.version = 11 : i64} {
  func.func @_gfp_kernel(%arg0: i32, %arg1: memref<8x1xf32, #tpu.memory_space<vmem>>, %arg2: memref<1x256xf32, #tpu.memory_space<vmem>>, %arg3: memref<8x512xf32, #tpu.memory_space<vmem>>) attributes {dimension_semantics = [#tpu.dimension_semantics<parallel>], iteration_bounds = array<i64: 1>, scalar_prefetch = 0 : i64, scratch_operands = 0 : i64, tpu.core_type = #tpu.core_type<tc>, window_params = [{transform_indices = @transform_0, window_bounds = array<i64: 8, 1>}, {pipeline_mode = #tpu.pipeline_mode<synchronous>, transform_indices = @transform_1, window_bounds = array<i64: 1, 256>}, {transform_indices = @transform_2, window_bounds = array<i64: 8, 512>}]} {
    %c0 = arith.constant 0 : index
    %c0_0 = arith.constant 0 : index
    %0 = vector.load %arg1[%c0, %c0_0] : memref<8x1xf32, #tpu.memory_space<vmem>>, vector<8x1xf32>
    %c0_1 = arith.constant 0 : index
    %c0_2 = arith.constant 0 : index
    %1 = vector.load %arg2[%c0_1, %c0_2] : memref<1x256xf32, #tpu.memory_space<vmem>>, vector<1x256xf32>
    %2 = vector.broadcast %0 : vector<8x1xf32> to vector<8x256xf32>
    %3 = vector.broadcast %1 : vector<1x256xf32> to vector<8x256xf32>
    %4 = arith.mulf %2, %3 : vector<8x256xf32>
    %5 = math.sin %4 : vector<8x256xf32>
    %c0_3 = arith.constant 0 : index
    %c0_4 = arith.constant 0 : index
    %6 = vector.load %arg3[%c0_3, %c0_4] : memref<8x512xf32, #tpu.memory_space<vmem>>, vector<8x256xf32>
    tpu.vector_store %arg3[%c0_3, %c0_4], %5 {strides = array<i32>} : memref<8x512xf32, #tpu.memory_space<vmem>>, vector<8x256xf32>,
    %7 = math.cos %4 : vector<8x256xf32>
    %c0_5 = arith.constant 0 : index
    %c256 = arith.constant 256 : index
    %8 = vector.load %arg3[%c0_5, %c256] : memref<8x512xf32, #tpu.memory_space<vmem>>, vector<8x256xf32>
    tpu.vector_store %arg3[%c0_5, %c256], %7 {strides = array<i32>} : memref<8x512xf32, #tpu.memory_space<vmem>>, vector<8x256xf32>,
    return
  }
  func.func @transform_0(%arg0: i32) -> (i32, i32) {
    %c0_i32 = arith.constant 0 : i32
    %c0_i32_0 = arith.constant 0 : i32
    return %arg0, %c0_i32 : i32, i32
  }
  func.func @transform_1(%arg0: i32) -> (i32, i32) {
    %c0_i32 = arith.constant 0 : i32
    %c0_i32_0 = arith.constant 0 : i32
    %c0_i32_1 = arith.constant 0 : i32
    return %c0_i32, %c0_i32_0 : i32, i32
  }
  func.func @transform_2(%arg0: i32) -> (i32, i32) {
    %c0_i32 = arith.constant 0 : i32
    %c0_i32_0 = arith.constant 0 : i32
    return %arg0, %c0_i32 : i32, i32
  }
}

</mosaic_0001>

<llo_original>
// kernel: fwd.1
$region0: #{fwd.1}
  #allocation0 [shape = 'u32[]', space=smem, size = 0x4, offset = 0x4, fixed_abs, tag = 'smem constant byte address 0x4 - core index']
  #allocation1 [shape = 'u32[72,128]{1,0:T(1,128)}', space=vmem, size = 0x9000, scoped, tag = 'internal scratch']
  %s0 = inlined_call_operand.vmem [shape: f32[8,1], index: 0, kind: input, shape index: {}]
  %s1 = inlined_call_operand.vmem [shape: f32[1,256], index: 1, kind: input, shape index: {}]
  %s2 = inlined_call_operand.hbm [shape: f32[8,512], index: 2, kind: output, shape index: {}]
  %s3 = sld [smem:[#allocation0]]
  $region18: #{fwd.1} parent=0
    _
  %s5 = ssub.s32 1, %s3
  %s6 = scalar_select 0, %s5, %s3
  $region1: #{fwd.1} parent=0
    #allocation2 [shape = 'u8[16384]{0}', space=vmem, size = 0x4000, scoped, tag = 'output window, operand 0, single buffered']
    #allocation3 [shape = 's32[1]{0}', space=sflag, size = 0x4, scoped, tag = 'scoped memory for fwd.1']
    %7 = vsyncpa [#allocation3], 0
    // Predicated region
    $region2: #{fwd.1} parent=1 // pred_check
      _
    $region3: #{fwd.1} parent=1 // pred_check_branch
      %9 = sbr.rel (0) target = $region5
    $region4: #{fwd.1} parent=1 // pred_region
      _
    $region5: #{fwd.1} parent=1 // pred_fallthru
      _
    // Predicated region
    $region6: #{fwd.1} parent=1 // pred_check
      _
    $region7: #{fwd.1} parent=1 // pred_check_branch
      %11 = sbr.rel (0) target = $region9
    $region8: #{fwd.1} parent=1 // pred_region
      _
    $region9: #{fwd.1} parent=1 // pred_fallthru
      _
    %v12 = vld [vmem:[%s0] sm:$0xff]
    %v13 = vld [vmem:[%s1] sm:$0x3]
    %15 = vset.pattern.permute.xlu0 0
    %16 = vperm.xlu0 %15, %v12
    %v17 = vpop.permute.xlu0 %16
    %v20 = vperm.slane %v13, 0
    %v21 = vperm.slane %v13, 1
    %v24 = vmul.f32 %v17, %v20
    %v25 = vmul.f32 %v17, %v21
    %v26 = vand.u32 2147483647, %v24
    %vm27 = vcmp.le.f32.partialorder %v26, 0.7853982
    %vm28 = vcmp.lt.s32.totalorder %v24, 0
    %v29 = vand.u32 %v24, 2139095040
    %v30 = vshrl.u32 %v29, 23
    %v31 = vsub.s32 %v30, 127
    %v32 = vand.u32 2147483647, %v24
    %v33 = vand.u32 %v32, 8388607
    %v34 = vor.u32 %v33, 8388608
    %v35 = vsub.s32 0, %v34
    %v36 = vadd.s32 %v31, 1
    %vm37 = vcmp.gt.s32.totalorder %v36, 0
    %v38 = vsel %vm37, %v36, 0
    %v39 = vshrl.u32 %v38, 5
    %v40 = vand.u32 %v38, 31
    %v41 = vsub.s32 32, %v40
    %v42 = vshrl.u32 683565275, %v41
    %v43 = vshll.u32 683565275, %v40
    %v44 = vshrl.u32 2475754826, %v41
    %v45 = vor.u32 %v43, %v44
    %v46 = vshll.u32 2475754826, %v40
    %v47 = vshrl.u32 2131351028, %v41
    %v48 = vor.u32 %v46, %v47
    %v49 = vshll.u32 2131351028, %v40
    %v50 = vshrl.u32 2102212464, %v41
    %v51 = vor.u32 %v49, %v50
    %v52 = vshll.u32 2102212464, %v40
    %v53 = vshrl.u32 920167782, %v41
    %v54 = vor.u32 %v52, %v53
    %v55 = vshll.u32 920167782, %v40
    %v56 = vshrl.u32 1326507024, %v41
    %v57 = vor.u32 %v55, %v56
    %vm58 = vcmp.lt.s32.totalorder %v39, 1
    %vm59 = vcmp.lt.s32.totalorder %v39, 2
    %vm60 = vcmp.lt.s32.totalorder %v39, 3
    %vm61 = vcmp.lt.s32.totalorder %v39, 4
    %v62 = vsel %vm58, %v42, %v45
    %v63 = vsel %vm61, %v51, 2102212464
    %v64 = vsel %vm60, %v48, %v63
    %v65 = vsel %vm59, %v62, %v64
    %v66 = vsel %vm58, %v45, %v48
    %v67 = vsel %vm61, %v54, 920167782
    %v68 = vsel %vm60, %v51, %v67
    %v69 = vsel %vm59, %v66, %v68
    %v70 = vsel %vm58, %v48, %v51
    %v71 = vsel %vm61, %v57, 1326507024
    %v72 = vsel %vm60, %v54, %v71
    %v73 = vsel %vm59, %v70, %v72
    %v74 = vshll.u32 %v34, 8
    %v75 = vand.u32 %v74, 65535
    %v76 = vshrl.u32 %v74, 16
    %v77 = vand.u32 %v73, 65535
    %v78 = vshrl.u32 %v73, 16
    %v79 = vmul.u32 %v75, %v77
    %v80 = vmul.u32 %v75, %v78
    %v81 = vmul.u32 %v76, %v77
    %v82 = vmul.u32 %v76, %v78
    %v83 = vshll.u32 %v80, 16
    %v84 = vshrl.u32 %v80, 16
    %v85 = vshll.u32 %v81, 16
    %v86 = vshrl.u32 %v81, 16
    %vm87 = vc.u32 %v79, %v83
    %v88 = vsel %vm87, 1, 0
    %v89 = vadd.s32 %v79, %v83
    %v90 = vadd.s32 %v82, %v88
    %vm91 = vc.u32 %v89, %v85
    %v92 = vsel %vm91, 1, 0
    %v93 = vadd.s32 %v89, %v85
    %v94 = vadd.s32 %v90, %v92
    %v95 = vadd.s32 %v94, %v84
    %v96 = vadd.s32 %v95, %v86
    %v97 = vand.u32 %v74, 65535
    %v98 = vshrl.u32 %v74, 16
    %v99 = vand.u32 %v69, 65535
    %v100 = vshrl.u32 %v69, 16
    %v101 = vmul.u32 %v97, %v99
    %v102 = vmul.u32 %v97, %v100
    %v103 = vmul.u32 %v98, %v99
    %v104 = vmul.u32 %v98, %v100
    %v105 = vshll.u32 %v102, 16
    %v106 = vshrl.u32 %v102, 16
    %v107 = vshll.u32 %v103, 16
    %v108 = vshrl.u32 %v103, 16
    %vm109 = vc.u32 %v101, %v105
    %v110 = vsel %vm109, 1, 0
    %v111 = vadd.s32 %v101, %v105
    %v112 = vadd.s32 %v104, %v110
    %vm113 = vc.u32 %v111, %v107
    %v114 = vsel %vm113, 1, 0
    %v115 = vadd.s32 %v111, %v107
    %v116 = vadd.s32 %v112, %v114
    %v117 = vadd.s32 %v116, %v106
    %v118 = vadd.s32 %v117, %v108
    %v119 = vmul.u32 %v74, %v65
    %v120 = vadd.s32 %v96, %v115
    %vm121 = vc.u32 %v96, %v115
    %v122 = vadd.s32 %v118, 1
    %v123 = vsel %vm121, %v122, %v118
    %v124 = vadd.s32 %v119, %v123
    %v125 = vadd.s32 %v124, 536870912
    %v126 = vshrl.u32 %v125, 30
    %v127 = vshll.u32 %v126, 30
    %v128 = vsub.s32 %v124, %v127
    %vm129 = vcmp.lt.s32.totalorder %v128, 0
    %v130 = vsub.s32 0, %v128
    %v131 = vsel %vm129, %v130, %v128
    %v132 = vclz %v131
    %v133 = vsub.s32 %v132, 2
    %vm134 = vcmp.gt.s32.totalorder 0, %v133
    %v135 = vsel %vm134, 0, %v133
    %v136 = vsub.s32 32, %v135
    %v137 = vshll.u32 %v128, %v135
    %v138 = vshrl.u32 %v120, %v136
    %v139 = vor.u32 %v137, %v138
    %v140 = vsub.s32 4294967266, %v135
    %v141 = vadd.s32 %v140, 127
    %v142 = vshll.u32 %v141, 23
    %v143 = vor.u32 4788187, %v142
    %v144 = vand.u32 2147483647, %v143
    %v146 = vcvt.s32.f32 %v139
    %v147 = vmul.f32 %v146, %v144
    %v148 = vxor.u32 %v147, 2147483648
    %v149 = vsel %vm28, %v148, %v147
    %v150 = vsub.s32 4, %v126
    %v151 = vsel %vm28, %v150, %v126
    %v152 = vsel %vm27, %v24, %v149
    %v153 = vsel %vm27, 0, %v151
    %v154 = vmul.f32 %v152, %v152
    %v155 = vmul.f32 %v154, -0.001358992
    %v156 = vadd.f32 %v155, 0.041655596
    %v157 = vmul.f32 %v154, %v156
    %v158 = vadd.f32 %v157, -0.4999988
    %v159 = vmul.f32 %v154, %v158
    %v160 = vadd.f32 1.0, %v159
    %v161 = vmul.f32 %v152, %v152
    %v162 = vmul.f32 %v161, -0.00019511016
    %v163 = vadd.f32 %v162, 0.008332121
    %v164 = vmul.f32 %v161, %v163
    %v165 = vadd.f32 %v164, -0.16666654
    %v166 = vmul.f32 %v161, %v165
    %v167 = vadd.f32 %v166, 1.0
    %v168 = vmul.f32 %v167, %v152
    %vm169 = vweird.f32 %v24
    %v170 = vadd.s32 %v153, 3
    %v171 = vand.u32 %v170, 3
    %vm172 = vcmp.lt.s32.totalorder %v171, 2
    %vm173 = vcmp.eq.s32.totalorder %v171, 0
    %v174 = vxor.u32 %v168, 2147483648
    %v175 = vsel %vm173, %v160, %v174
    %vm176 = vcmp.eq.s32.totalorder %v171, 2
    %v177 = vxor.u32 %v160, 2147483648
    %v178 = vsel %vm176, %v177, %v168
    %v179 = vsel %vm172, %v175, %v178
    %v180 = vsel %vm169, nan, %v179
    %v181 = vand.u32 2147483647, %v25
    %vm182 = vcmp.le.f32.partialorder %v181, 0.7853982
    %vm183 = vcmp.lt.s32.totalorder %v25, 0
    %v184 = vand.u32 %v25, 2139095040
    %v185 = vshrl.u32 %v184, 23
    %v186 = vsub.s32 %v185, 127
    %v187 = vand.u32 2147483647, %v25
    %v188 = vand.u32 %v187, 8388607
    %v189 = vor.u32 %v188, 8388608
    %v190 = vsub.s32 0, %v189
    %v191 = vadd.s32 %v186, 1
    %vm192 = vcmp.gt.s32.totalorder %v191, 0
    %v193 = vsel %vm192, %v191, 0
    %v194 = vshrl.u32 %v193, 5
    %v195 = vand.u32 %v193, 31
    %v196 = vsub.s32 32, %v195
    %v197 = vshrl.u32 683565275, %v196
    %v198 = vshll.u32 683565275, %v195
    %v199 = vshrl.u32 2475754826, %v196
    %v200 = vor.u32 %v198, %v199
    %v201 = vshll.u32 2475754826, %v195
    %v202 = vshrl.u32 2131351028, %v196
    %v203 = vor.u32 %v201, %v202
    %v204 = vshll.u32 2131351028, %v195
    %v205 = vshrl.u32 2102212464, %v196
    %v206 = vor.u32 %v204, %v205
    %v207 = vshll.u32 2102212464, %v195
    %v208 = vshrl.u32 920167782, %v196
    %v209 = vor.u32 %v207, %v208
    %v210 = vshll.u32 920167782, %v195
    %v211 = vshrl.u32 1326507024, %v196
    %v212 = vor.u32 %v210, %v211
    %vm213 = vcmp.lt.s32.totalorder %v194, 1
    %vm214 = vcmp.lt.s32.totalorder %v194, 2
    %vm215 = vcmp.lt.s32.totalorder %v194, 3
    %vm216 = vcmp.lt.s32.totalorder %v194, 4
    %v217 = vsel %vm213, %v197, %v200
    %v218 = vsel %vm216, %v206, 2102212464
    %v219 = vsel %vm215, %v203, %v218
    %v220 = vsel %vm214, %v217, %v219
    %v221 = vsel %vm213, %v200, %v203
    %v222 = vsel %vm216, %v209, 920167782
    %v223 = vsel %vm215, %v206, %v222
    %v224 = vsel %vm214, %v221, %v223
    %v225 = vsel %vm213, %v203, %v206
    %v226 = vsel %vm216, %v212, 1326507024
    %v227 = vsel %vm215, %v209, %v226
    %v228 = vsel %vm214, %v225, %v227
    %v229 = vshll.u32 %v189, 8
    %v230 = vand.u32 %v229, 65535
    %v231 = vshrl.u32 %v229, 16
    %v232 = vand.u32 %v228, 65535
    %v233 = vshrl.u32 %v228, 16
    %v234 = vmul.u32 %v230, %v232
    %v235 = vmul.u32 %v230, %v233
    %v236 = vmul.u32 %v231, %v232
    %v237 = vmul.u32 %v231, %v233
    %v238 = vshll.u32 %v235, 16
    %v239 = vshrl.u32 %v235, 16
    %v240 = vshll.u32 %v236, 16
    %v241 = vshrl.u32 %v236, 16
    %vm242 = vc.u32 %v234, %v238
    %v243 = vsel %vm242, 1, 0
    %v244 = vadd.s32 %v234, %v238
    %v245 = vadd.s32 %v237, %v243
    %vm246 = vc.u32 %v244, %v240
    %v247 = vsel %vm246, 1, 0
    %v248 = vadd.s32 %v244, %v240
    %v249 = vadd.s32 %v245, %v247
    %v250 = vadd.s32 %v249, %v239
    %v251 = vadd.s32 %v250, %v241
    %v252 = vand.u32 %v229, 65535
    %v253 = vshrl.u32 %v229, 16
    %v254 = vand.u32 %v224, 65535
    %v255 = vshrl.u32 %v224, 16
    %v256 = vmul.u32 %v252, %v254
    %v257 = vmul.u32 %v252, %v255
    %v258 = vmul.u32 %v253, %v254
    %v259 = vmul.u32 %v253, %v255
    %v260 = vshll.u32 %v257, 16
    %v261 = vshrl.u32 %v257, 16
    %v262 = vshll.u32 %v258, 16
    %v263 = vshrl.u32 %v258, 16
    %vm264 = vc.u32 %v256, %v260
    %v265 = vsel %vm264, 1, 0
    %v266 = vadd.s32 %v256, %v260
    %v267 = vadd.s32 %v259, %v265
    %vm268 = vc.u32 %v266, %v262
    %v269 = vsel %vm268, 1, 0
    %v270 = vadd.s32 %v266, %v262
    %v271 = vadd.s32 %v267, %v269
    %v272 = vadd.s32 %v271, %v261
    %v273 = vadd.s32 %v272, %v263
    %v274 = vmul.u32 %v229, %v220
    %v275 = vadd.s32 %v251, %v270
    %vm276 = vc.u32 %v251, %v270
    %v277 = vadd.s32 %v273, 1
    %v278 = vsel %vm276, %v277, %v273
    %v279 = vadd.s32 %v274, %v278
    %v280 = vadd.s32 %v279, 536870912
    %v281 = vshrl.u32 %v280, 30
    %v282 = vshll.u32 %v281, 30
    %v283 = vsub.s32 %v279, %v282
    %vm284 = vcmp.lt.s32.totalorder %v283, 0
    %v285 = vsub.s32 0, %v283
    %v286 = vsel %vm284, %v285, %v283
    %v287 = vclz %v286
    %v288 = vsub.s32 %v287, 2
    %vm289 = vcmp.gt.s32.totalorder 0, %v288
    %v290 = vsel %vm289, 0, %v288
    %v291 = vsub.s32 32, %v290
    %v292 = vshll.u32 %v283, %v290
    %v293 = vshrl.u32 %v275, %v291
    %v294 = vor.u32 %v292, %v293
    %v295 = vsub.s32 4294967266, %v290
    %v296 = vadd.s32 %v295, 127
    %v297 = vshll.u32 %v296, 23
    %v298 = vor.u32 4788187, %v297
    %v299 = vand.u32 2147483647, %v298
    %v301 = vcvt.s32.f32 %v294
    %v302 = vmul.f32 %v301, %v299
    %v303 = vxor.u32 %v302, 2147483648
    %v304 = vsel %vm183, %v303, %v302
    %v305 = vsub.s32 4, %v281
    %v306 = vsel %vm183, %v305, %v281
    %v307 = vsel %vm182, %v25, %v304
    %v308 = vsel %vm182, 0, %v306
    %v309 = vmul.f32 %v307, %v307
    %v310 = vmul.f32 %v309, -0.001358992
    %v311 = vadd.f32 %v310, 0.041655596
    %v312 = vmul.f32 %v309, %v311
    %v313 = vadd.f32 %v312, -0.4999988
    %v314 = vmul.f32 %v309, %v313
    %v315 = vadd.f32 1.0, %v314
    %v316 = vmul.f32 %v307, %v307
    %v317 = vmul.f32 %v316, -0.00019511016
    %v318 = vadd.f32 %v317, 0.008332121
    %v319 = vmul.f32 %v316, %v318
    %v320 = vadd.f32 %v319, -0.16666654
    %v321 = vmul.f32 %v316, %v320
    %v322 = vadd.f32 %v321, 1.0
    %v323 = vmul.f32 %v322, %v307
    %vm324 = vweird.f32 %v25
    %v325 = vadd.s32 %v308, 3
    %v326 = vand.u32 %v325, 3
    %vm327 = vcmp.lt.s32.totalorder %v326, 2
    %vm328 = vcmp.eq.s32.totalorder %v326, 0
    %v329 = vxor.u32 %v323, 2147483648
    %v330 = vsel %vm328, %v315, %v329
    %vm331 = vcmp.eq.s32.totalorder %v326, 2
    %v332 = vxor.u32 %v315, 2147483648
    %v333 = vsel %vm331, %v332, %v323
    %v334 = vsel %vm327, %v330, %v333
    %v335 = vsel %vm324, nan, %v334
    %336 = vst [vmem:[#allocation2] sm:$0xff] %v180
    %337 = vst [vmem:[#allocation2 + $0x8] sm:$0xff] %v335
    %v338 = vand.u32 2147483647, %v24
    %vm339 = vcmp.le.f32.partialorder %v338, 0.7853982
    %vm340 = vcmp.lt.s32.totalorder %v24, 0
    %v341 = vand.u32 %v24, 2139095040
    %v342 = vshrl.u32 %v341, 23
    %v343 = vsub.s32 %v342, 127
    %v344 = vand.u32 2147483647, %v24
    %v345 = vand.u32 %v344, 8388607
    %v346 = vor.u32 %v345, 8388608
    %v347 = vsub.s32 0, %v346
    %v348 = vadd.s32 %v343, 1
    %vm349 = vcmp.gt.s32.totalorder %v348, 0
    %v350 = vsel %vm349, %v348, 0
    %v351 = vshrl.u32 %v350, 5
    %v352 = vand.u32 %v350, 31
    %v353 = vsub.s32 32, %v352
    %v354 = vshrl.u32 683565275, %v353
    %v355 = vshll.u32 683565275, %v352
    %v356 = vshrl.u32 2475754826, %v353
    %v357 = vor.u32 %v355, %v356
    %v358 = vshll.u32 2475754826, %v352
    %v359 = vshrl.u32 2131351028, %v353
    %v360 = vor.u32 %v358, %v359
    %v361 = vshll.u32 2131351028, %v352
    %v362 = vshrl.u32 2102212464, %v353
    %v363 = vor.u32 %v361, %v362
    %v364 = vshll.u32 2102212464, %v352
    %v365 = vshrl.u32 920167782, %v353
    %v366 = vor.u32 %v364, %v365
    %v367 = vshll.u32 920167782, %v352
    %v368 = vshrl.u32 1326507024, %v353
    %v369 = vor.u32 %v367, %v368
    %vm370 = vcmp.lt.s32.totalorder %v351, 1
    %vm371 = vcmp.lt.s32.totalorder %v351, 2
    %vm372 = vcmp.lt.s32.totalorder %v351, 3
    %vm373 = vcmp.lt.s32.totalorder %v351, 4
    %v374 = vsel %vm370, %v354, %v357
    %v375 = vsel %vm373, %v363, 2102212464
    %v376 = vsel %vm372, %v360, %v375
    %v377 = vsel %vm371, %v374, %v376
    %v378 = vsel %vm370, %v357, %v360
    %v379 = vsel %vm373, %v366, 920167782
    %v380 = vsel %vm372, %v363, %v379
    %v381 = vsel %vm371, %v378, %v380
    %v382 = vsel %vm370, %v360, %v363
    %v383 = vsel %vm373, %v369, 1326507024
    %v384 = vsel %vm372, %v366, %v383
    %v385 = vsel %vm371, %v382, %v384
    %v386 = vshll.u32 %v346, 8
    %v387 = vand.u32 %v386, 65535
    %v388 = vshrl.u32 %v386, 16
    %v389 = vand.u32 %v385, 65535
    %v390 = vshrl.u32 %v385, 16
    %v391 = vmul.u32 %v387, %v389
    %v392 = vmul.u32 %v387, %v390
    %v393 = vmul.u32 %v388, %v389
    %v394 = vmul.u32 %v388, %v390
    %v395 = vshll.u32 %v392, 16
    %v396 = vshrl.u32 %v392, 16
    %v397 = vshll.u32 %v393, 16
    %v398 = vshrl.u32 %v393, 16
    %vm399 = vc.u32 %v391, %v395
    %v400 = vsel %vm399, 1, 0
    %v401 = vadd.s32 %v391, %v395
    %v402 = vadd.s32 %v394, %v400
    %vm403 = vc.u32 %v401, %v397
    %v404 = vsel %vm403, 1, 0
    %v405 = vadd.s32 %v401, %v397
    %v406 = vadd.s32 %v402, %v404
    %v407 = vadd.s32 %v406, %v396
    %v408 = vadd.s32 %v407, %v398
    %v409 = vand.u32 %v386, 65535
    %v410 = vshrl.u32 %v386, 16
    %v411 = vand.u32 %v381, 65535
    %v412 = vshrl.u32 %v381, 16
    %v413 = vmul.u32 %v409, %v411
    %v414 = vmul.u32 %v409, %v412
    %v415 = vmul.u32 %v410, %v411
    %v416 = vmul.u32 %v410, %v412
    %v417 = vshll.u32 %v414, 16
    %v418 = vshrl.u32 %v414, 16
    %v419 = vshll.u32 %v415, 16
    %v420 = vshrl.u32 %v415, 16
    %vm421 = vc.u32 %v413, %v417
    %v422 = vsel %vm421, 1, 0
    %v423 = vadd.s32 %v413, %v417
    %v424 = vadd.s32 %v416, %v422
    %vm425 = vc.u32 %v423, %v419
    %v426 = vsel %vm425, 1, 0
    %v427 = vadd.s32 %v423, %v419
    %v428 = vadd.s32 %v424, %v426
    %v429 = vadd.s32 %v428, %v418
    %v430 = vadd.s32 %v429, %v420
    %v431 = vmul.u32 %v386, %v377
    %v432 = vadd.s32 %v408, %v427
    %vm433 = vc.u32 %v408, %v427
    %v434 = vadd.s32 %v430, 1
    %v435 = vsel %vm433, %v434, %v430
    %v436 = vadd.s32 %v431, %v435
    %v437 = vadd.s32 %v436, 536870912
    %v438 = vshrl.u32 %v437, 30
    %v439 = vshll.u32 %v438, 30
    %v440 = vsub.s32 %v436, %v439
    %vm441 = vcmp.lt.s32.totalorder %v440, 0
    %v442 = vsub.s32 0, %v440
    %v443 = vsel %vm441, %v442, %v440
    %v444 = vclz %v443
    %v445 = vsub.s32 %v444, 2
    %vm446 = vcmp.gt.s32.totalorder 0, %v445
    %v447 = vsel %vm446, 0, %v445
    %v448 = vsub.s32 32, %v447
    %v449 = vshll.u32 %v440, %v447
    %v450 = vshrl.u32 %v432, %v448
    %v451 = vor.u32 %v449, %v450
    %v452 = vsub.s32 4294967266, %v447
    %v453 = vadd.s32 %v452, 127
    %v454 = vshll.u32 %v453, 23
    %v455 = vor.u32 4788187, %v454
    %v456 = vand.u32 2147483647, %v455
    %v458 = vcvt.s32.f32 %v451
    %v459 = vmul.f32 %v458, %v456
    %v460 = vxor.u32 %v459, 2147483648
    %v461 = vsel %vm340, %v460, %v459
    %v462 = vsub.s32 4, %v438
    %v463 = vsel %vm340, %v462, %v438
    %v464 = vsel %vm339, %v24, %v461
    %v465 = vsel %vm339, 0, %v463
    %v466 = vmul.f32 %v464, %v464
    %v467 = vmul.f32 %v466, -0.001358992
    %v468 = vadd.f32 %v467, 0.041655596
    %v469 = vmul.f32 %v466, %v468
    %v470 = vadd.f32 %v469, -0.4999988
    %v471 = vmul.f32 %v466, %v470
    %v472 = vadd.f32 1.0, %v471
    %v473 = vmul.f32 %v464, %v464
    %v474 = vmul.f32 %v473, -0.00019511016
    %v475 = vadd.f32 %v474, 0.008332121
    %v476 = vmul.f32 %v473, %v475
    %v477 = vadd.f32 %v476, -0.16666654
    %v478 = vmul.f32 %v473, %v477
    %v479 = vadd.f32 %v478, 1.0
    %v480 = vmul.f32 %v479, %v464
    %vm481 = vweird.f32 %v24
    %v482 = vand.u32 %v465, 3
    %vm483 = vcmp.lt.s32.totalorder %v482, 2
    %vm484 = vcmp.eq.s32.totalorder %v482, 0
    %v485 = vxor.u32 %v480, 2147483648
    %v486 = vsel %vm484, %v472, %v485
    %vm487 = vcmp.eq.s32.totalorder %v482, 2
    %v488 = vxor.u32 %v472, 2147483648
    %v489 = vsel %vm487, %v488, %v480
    %v490 = vsel %vm483, %v486, %v489
    %v491 = vsel %vm481, nan, %v490
    %v492 = vand.u32 2147483647, %v25
    %vm493 = vcmp.le.f32.partialorder %v492, 0.7853982
    %vm494 = vcmp.lt.s32.totalorder %v25, 0
    %v495 = vand.u32 %v25, 2139095040
    %v496 = vshrl.u32 %v495, 23
    %v497 = vsub.s32 %v496, 127
    %v498 = vand.u32 2147483647, %v25
    %v499 = vand.u32 %v498, 8388607
    %v500 = vor.u32 %v499, 8388608
    %v501 = vsub.s32 0, %v500
    %v502 = vadd.s32 %v497, 1
    %vm503 = vcmp.gt.s32.totalorder %v502, 0
    %v504 = vsel %vm503, %v502, 0
    %v505 = vshrl.u32 %v504, 5
    %v506 = vand.u32 %v504, 31
    %v507 = vsub.s32 32, %v506
    %v508 = vshrl.u32 683565275, %v507
    %v509 = vshll.u32 683565275, %v506
    %v510 = vshrl.u32 2475754826, %v507
    %v511 = vor.u32 %v509, %v510
    %v512 = vshll.u32 2475754826, %v506
    %v513 = vshrl.u32 2131351028, %v507
    %v514 = vor.u32 %v512, %v513
    %v515 = vshll.u32 2131351028, %v506
    %v516 = vshrl.u32 2102212464, %v507
    %v517 = vor.u32 %v515, %v516
    %v518 = vshll.u32 2102212464, %v506
    %v519 = vshrl.u32 920167782, %v507
    %v520 = vor.u32 %v518, %v519
    %v521 = vshll.u32 920167782, %v506
    %v522 = vshrl.u32 1326507024, %v507
    %v523 = vor.u32 %v521, %v522
    %vm524 = vcmp.lt.s32.totalorder %v505, 1
    %vm525 = vcmp.lt.s32.totalorder %v505, 2
    %vm526 = vcmp.lt.s32.totalorder %v505, 3
    %vm527 = vcmp.lt.s32.totalorder %v505, 4
    %v528 = vsel %vm524, %v508, %v511
    %v529 = vsel %vm527, %v517, 2102212464
    %v530 = vsel %vm526, %v514, %v529
    %v531 = vsel %vm525, %v528, %v530
    %v532 = vsel %vm524, %v511, %v514
    %v533 = vsel %vm527, %v520, 920167782
    %v534 = vsel %vm526, %v517, %v533
    %v535 = vsel %vm525, %v532, %v534
    %v536 = vsel %vm524, %v514, %v517
    %v537 = vsel %vm527, %v523, 1326507024
    %v538 = vsel %vm526, %v520, %v537
    %v539 = vsel %vm525, %v536, %v538
    %v540 = vshll.u32 %v500, 8
    %v541 = vand.u32 %v540, 65535
    %v542 = vshrl.u32 %v540, 16
    %v543 = vand.u32 %v539, 65535
    %v544 = vshrl.u32 %v539, 16
    %v545 = vmul.u32 %v541, %v543
    %v546 = vmul.u32 %v541, %v544
    %v547 = vmul.u32 %v542, %v543
    %v548 = vmul.u32 %v542, %v544
    %v549 = vshll.u32 %v546, 16
    %v550 = vshrl.u32 %v546, 16
    %v551 = vshll.u32 %v547, 16
    %v552 = vshrl.u32 %v547, 16
    %vm553 = vc.u32 %v545, %v549
    %v554 = vsel %vm553, 1, 0
    %v555 = vadd.s32 %v545, %v549
    %v556 = vadd.s32 %v548, %v554
    %vm557 = vc.u32 %v555, %v551
    %v558 = vsel %vm557, 1, 0
    %v559 = vadd.s32 %v555, %v551
    %v560 = vadd.s32 %v556, %v558
    %v561 = vadd.s32 %v560, %v550
    %v562 = vadd.s32 %v561, %v552
    %v563 = vand.u32 %v540, 65535
    %v564 = vshrl.u32 %v540, 16
    %v565 = vand.u32 %v535, 65535
    %v566 = vshrl.u32 %v535, 16
    %v567 = vmul.u32 %v563, %v565
    %v568 = vmul.u32 %v563, %v566
    %v569 = vmul.u32 %v564, %v565
    %v570 = vmul.u32 %v564, %v566
    %v571 = vshll.u32 %v568, 16
    %v572 = vshrl.u32 %v568, 16
    %v573 = vshll.u32 %v569, 16
    %v574 = vshrl.u32 %v569, 16
    %vm575 = vc.u32 %v567, %v571
    %v576 = vsel %vm575, 1, 0
    %v577 = vadd.s32 %v567, %v571
    %v578 = vadd.s32 %v570, %v576
    %vm579 = vc.u32 %v577, %v573
    %v580 = vsel %vm579, 1, 0
    %v581 = vadd.s32 %v577, %v573
    %v582 = vadd.s32 %v578, %v580
    %v583 = vadd.s32 %v582, %v572
    %v584 = vadd.s32 %v583, %v574
    %v585 = vmul.u32 %v540, %v531
    %v586 = vadd.s32 %v562, %v581
    %vm587 = vc.u32 %v562, %v581
    %v588 = vadd.s32 %v584, 1
    %v589 = vsel %vm587, %v588, %v584
    %v590 = vadd.s32 %v585, %v589
    %v591 = vadd.s32 %v590, 536870912
    %v592 = vshrl.u32 %v591, 30
    %v593 = vshll.u32 %v592, 30
    %v594 = vsub.s32 %v590, %v593
    %vm595 = vcmp.lt.s32.totalorder %v594, 0
    %v596 = vsub.s32 0, %v594
    %v597 = vsel %vm595, %v596, %v594
    %v598 = vclz %v597
    %v599 = vsub.s32 %v598, 2
    %vm600 = vcmp.gt.s32.totalorder 0, %v599
    %v601 = vsel %vm600, 0, %v599
    %v602 = vsub.s32 32, %v601
    %v603 = vshll.u32 %v594, %v601
    %v604 = vshrl.u32 %v586, %v602
    %v605 = vor.u32 %v603, %v604
    %v606 = vsub.s32 4294967266, %v601
    %v607 = vadd.s32 %v606, 127
    %v608 = vshll.u32 %v607, 23
    %v609 = vor.u32 4788187, %v608
    %v610 = vand.u32 2147483647, %v609
    %v612 = vcvt.s32.f32 %v605
    %v613 = vmul.f32 %v612, %v610
    %v614 = vxor.u32 %v613, 2147483648
    %v615 = vsel %vm494, %v614, %v613
    %v616 = vsub.s32 4, %v592
    %v617 = vsel %vm494, %v616, %v592
    %v618 = vsel %vm493, %v25, %v615
    %v619 = vsel %vm493, 0, %v617
    %v620 = vmul.f32 %v618, %v618
    %v621 = vmul.f32 %v620, -0.001358992
    %v622 = vadd.f32 %v621, 0.041655596
    %v623 = vmul.f32 %v620, %v622
    %v624 = vadd.f32 %v623, -0.4999988
    %v625 = vmul.f32 %v620, %v624
    %v626 = vadd.f32 1.0, %v625
    %v627 = vmul.f32 %v618, %v618
    %v628 = vmul.f32 %v627, -0.00019511016
    %v629 = vadd.f32 %v628, 0.008332121
    %v630 = vmul.f32 %v627, %v629
    %v631 = vadd.f32 %v630, -0.16666654
    %v632 = vmul.f32 %v627, %v631
    %v633 = vadd.f32 %v632, 1.0
    %v634 = vmul.f32 %v633, %v618
    %vm635 = vweird.f32 %v25
    %v636 = vand.u32 %v619, 3
    %vm637 = vcmp.lt.s32.totalorder %v636, 2
    %vm638 = vcmp.eq.s32.totalorder %v636, 0
    %v639 = vxor.u32 %v634, 2147483648
    %v640 = vsel %vm638, %v626, %v639
    %vm641 = vcmp.eq.s32.totalorder %v636, 2
    %v642 = vxor.u32 %v626, 2147483648
    %v643 = vsel %vm641, %v642, %v634
    %v644 = vsel %vm637, %v640, %v643
    %v645 = vsel %vm635, nan, %v644
    %646 = vst [vmem:[#allocation2 + $0x10] sm:$0xff] %v491
    %647 = vst [vmem:[#allocation2 + $0x18] sm:$0xff] %v645
    // Predicated region
    $region10: #{fwd.1} parent=1 // pred_check
      _
    $region11: #{fwd.1} parent=1 // pred_check_branch
      %649 = sbr.rel (0) target = $region13
    $region12: #{fwd.1} parent=1 // pred_region
      %651 = vsyncadd [#allocation3], 0
      %s653 = sshll.u32 [#allocation2], 4
      %s654 = int_to_ptr.vmem [resolvable:$true] %s653
      %s655 = sshll.u32 %s2, 4
      %s656 = int_to_ptr.hbm [resolvable:$true] %s655
      %658 = dma.vmem_to_hbm [thread:$0]  %s654, 512, %s656, [#allocation3]
    $region13: #{fwd.1} parent=1 // pred_fallthru
      _
    // Predicated region
    $region14: #{fwd.1} parent=1 // pred_check
      _
    $region15: #{fwd.1} parent=1 // pred_check_branch
      %660 = sbr.rel (0) target = $region17
    $region16: #{fwd.1} parent=1 // pred_region
      %662 = dma.done [#allocation3], 512
    $region17: #{fwd.1} parent=1 // pred_fallthru
      _
    %663 = vsyncpa [#allocation3], 1

</llo_original>
